<compile_context>
chip_gen: v7x
topology: tpu7x:2x2x1
jax: 0.10.0
libtpu: 0.0.40
codegen_flags: <defaults>
</compile_context>

<pallas_src>
import functools

import jax
import jax.numpy as jnp
from jax import lax
from jax.experimental import pallas as pl
from jax.experimental.pallas import tpu as pltpu


# ----------------------------------------------------------------------------
# Kernels
# ----------------------------------------------------------------------------

def _trend_kernel_3d(pred_ref, target_ref, out_ref, acc_mse, acc_trend, *,
                     trend_weight: float, n_mse: int, n_trend: int,
                     r_total: int, c_dim: int, inner_r: int, r_tile: int,
                     need_mask: bool, wide_acc: bool):
    """Path A: (B, C, R) layout (R lane-dense). grid = (split, b, r)."""
    s = pl.program_id(0)
    b = pl.program_id(1)
    r = pl.program_id(2)

    @pl.when(jnp.logical_and(b == 0, r == 0))
    def _():
        acc_mse[...] = jnp.zeros_like(acc_mse)
        acc_trend[...] = jnp.zeros_like(acc_trend)

    # Elementwise hot path (VPU); f32 in-register regardless of input dtype.
    err = target_ref[...].astype(jnp.float32) - pred_ref[...].astype(jnp.float32)

    if need_mask:
        # Zero garbage lanes of the partial tail block and of fully
        # out-of-range (clamped duplicate) blocks produced by the core split.
        g = s * inner_r + r                       # UNclamped global r-block id
        lane = lax.broadcasted_iota(jnp.int32, (1, 1, r_tile), 2) + g * r_tile
        err = jnp.where(lane < r_total, err, 0.0)

    sq = err * err
    if wide_acc:
        # Sum over the B tile only: plain VPU vreg adds, no XLU per step.
        acc_mse[...] += jnp.sum(sq, axis=0)                       # (C, r_tile)
    else:
        acc_mse[...] += jnp.sum(jnp.sum(sq, axis=1), axis=0, keepdims=True)

    if c_dim > 1:
        d = err[:, 1:, :] - err[:, :-1, :]        # == pred_trend - target_trend
        dd = d * d
        if wide_acc:
            acc_trend[...] += jnp.sum(dd, axis=0)                 # (C-1, r_tile)
        else:
            acc_trend[...] += jnp.sum(jnp.sum(dd, axis=1), axis=0, keepdims=True)

    @pl.when(jnp.logical_and(b == pl.num_programs(1) - 1,
                             r == pl.num_programs(2) - 1))
    def _():
        mse = jnp.sum(acc_mse[...]) / jnp.float32(n_mse)
        val = mse
        if c_dim > 1:
            trend = jnp.sum(acc_trend[...]) / jnp.float32(n_trend)
            val = mse + jnp.float32(trend_weight) * trend
        out_ref[0, 0] = val


def _trend_kernel_2d(pred_ref, target_ref, out_ref, acc_mse, acc_trend, *,
                     trend_weight: float, n_mse: int, n_trend: int,
                     b_total: int, tile_b: int, m_dim: int, r_dim: int,
                     c_dim: int, need_row_mask: bool):
    """Path B: (B, C*R) lane-dense layout for small R; trend = lane shift by R."""
    i = pl.program_id(0)

    @pl.when(i == 0)
    def _():
        acc_mse[...] = jnp.zeros_like(acc_mse)
        acc_trend[...] = jnp.zeros_like(acc_trend)

    err = target_ref[...].astype(jnp.float32) - pred_ref[...].astype(jnp.float32)

    if need_row_mask:
        row = lax.broadcasted_iota(jnp.int32, (tile_b, 1), 0) + i * tile_b
        err = jnp.where(row < b_total, err, 0.0)

    acc_mse[...] += jnp.sum(err * err, axis=0, keepdims=True)      # (1, M)

    if c_dim > 1:
        # Flattened (c, r) index j: err[:, j + R] - err[:, j] enumerates
        # exactly the C-axis first differences.
        d = err[:, r_dim:] - err[:, :m_dim - r_dim]
        acc_trend[...] += jnp.sum(d * d, axis=0, keepdims=True)    # (1, M-R)

    @pl.when(i == pl.num_programs(0) - 1)
    def _():
        mse = jnp.sum(acc_mse[...]) / jnp.float32(n_mse)
        val = mse
        if c_dim > 1:
            trend = jnp.sum(acc_trend[...]) / jnp.float32(n_trend)
            val = mse + jnp.float32(trend_weight) * trend
        out_ref[0, 0] = val


# ----------------------------------------------------------------------------
# Tiling helpers
# ----------------------------------------------------------------------------

def _vmem_capacity_bytes() -> int:
    """Physical VMEM of the current chip (v5e/v6e: 128 MiB, v7x: 64 MiB)."""
    try:
        cap = getattr(pltpu.get_tpu_info(), "vmem_capacity_bytes", None)
        if cap:
            return int(cap)
    except Exception:
        pass
    return 64 * 1024 * 1024   # conservative fallback (v7x-sized)


def _largest_divisor_leq(n: int, cap: int) -> int:
    cap = max(1, min(n, cap))
    for d in range(cap, 0, -1):
        if n % d == 0:
            return d
    return 1


def _pick_r_tile(r_total: int, r_cap: int) -> int:
    """r_cap is a multiple of 128. Prefer a dividing tile (no tail mask)."""
    if r_total <= r_cap:
        return r_total            # block dim == full array dim is always legal
    t = r_cap
    floor = max(128, r_cap // 2)
    while t >= floor:
        if r_total % t == 0:
            return t
        t -= 128
    return r_cap                  # tail block masked in-kernel


# ----------------------------------------------------------------------------
# Wrapper
# ----------------------------------------------------------------------------

def trend_loss(pred: jax.Array, target: jax.Array,
               trend_weight: float = 0.3) -> jax.Array:
    assert pred.shape == target.shape, "pred/target shapes must match"
    assert pred.ndim >= 2, "TrendLoss requires at least 2 dims (trend axis = dim 1)"

    B, C = int(pred.shape[0]), int(pred.shape[1])
    R = 1
    for sdim in pred.shape[2:]:
        R *= int(sdim)
    assert R < 2 ** 31, "per-axis element count must fit int32 lane indexing"

    n_mse = B * C * R
    n_trend = B * (C - 1) * R if C > 1 else 1

    itemsize = pred.dtype.itemsize
    vmem_cap = _vmem_capacity_bytes()
    vmem_limit = max(32 * 1024 * 1024,
                     min(vmem_cap * 3 // 4, vmem_cap - (16 << 20)))
    # Per grid step we hold: 2 inputs x 2 pipeline buffers in NATIVE dtype plus
    # ~2 block-sized f32 temporaries from the in-kernel cast.  Leave headroom
    # inside vmem_limit for accumulators and Mosaic-internal scratch.
    per_elem = 4 * itemsize + 8
    cap_elems = max(8 * 128, (vmem_limit * 3 // 4) // per_elem)

    cost = pl.CostEstimate(
        flops=3 * n_mse + (3 * n_trend if C > 1 else 0),
        transcendentals=0,
        bytes_accessed=2 * n_mse * itemsize + 4)

    if R >= 128:
        # ------------------- Path A: lane-dense over R ----------------------
        pred3 = pred.reshape(B, C, R)        # metadata-only reshape
        target3 = target.reshape(B, C, R)

        tile_b = _largest_divisor_leq(B, max(1, cap_elems // (C * 128)))
        r_cap = max(128, (cap_elems // (tile_b * C)) // 128 * 128)
        r_tile = _pick_r_tile(R, r_cap)
        n_rblocks = pl.cdiv(R, r_tile)

        # Split the R range across TensorCores via a leading "parallel" axis
        # (2x DMA/compute streams on v7x; sequential & free on 1-TC chips).
        n_split = 2 if n_rblocks >= 2 else 1
        inner_r = pl.cdiv(n_rblocks, n_split)
        need_mask = (R % r_tile != 0) or (n_split * inner_r != n_rblocks)

        # Lane-plane accumulators (defer the cross-sublane reduce) unless C is
        # so large that they would eat a meaningful slice of VMEM.
        wide_acc = (2 * C * r_tile * 4) <= vmem_limit // 8
        acc_mse_shape = (C, r_tile) if wide_acc else (1, r_tile)
        acc_trend_shape = (max(C - 1, 1), r_tile) if wide_acc else (1, r_tile)

        def in_map(s, b, r):
            g = jnp.minimum(s * inner_r + r, n_rblocks - 1)   # clamp OOB dup
            return (b, 0, g)

        kernel = functools.partial(
            _trend_kernel_3d, trend_weight=float(trend_weight),
            n_mse=int(n_mse), n_trend=int(n_trend), r_total=int(R),
            c_dim=int(C), inner_r=int(inner_r), r_tile=int(r_tile),
            need_mask=bool(need_mask), wide_acc=bool(wide_acc))

        out = pl.pallas_call(
            kernel,
            out_shape=jax.ShapeDtypeStruct((n_split, 1), jnp.float32),
            grid_spec=pltpu.PrefetchScalarGridSpec(
                num_scalar_prefetch=0,
                grid=(n_split, B // tile_b, inner_r),
                in_specs=[pl.BlockSpec((tile_b, C, r_tile), in_map),
                          pl.BlockSpec((tile_b, C, r_tile), in_map)],
                out_specs=pl.BlockSpec((1, 1), lambda s, b, r: (s, 0),
                                       memory_space=pltpu.SMEM),
                scratch_shapes=[pltpu.VMEM(acc_mse_shape, jnp.float32),
                                pltpu.VMEM(acc_trend_shape, jnp.float32)],
            ),
            compiler_params=pltpu.CompilerParams(
                dimension_semantics=("parallel", "arbitrary", "arbitrary"),
                vmem_limit_bytes=int(vmem_limit)),
            cost_estimate=cost,
        )(pred3, target3)
        return jnp.sum(out)           # add the per-core partials

    # ----------------- Path B: lane-dense over C*R (small R) ----------------
    M = C * R
    pred2 = pred.reshape(B, M)            # metadata-only reshape
    target2 = target.reshape(B, M)

    if B * M <= cap_elems or B <= 8:
        tile_b = B
    else:
        tile_b = max(8, min((cap_elems // M) // 8 * 8, (B // 8) * 8))
        # TODO(synk): if even an (8, C*R) block exceeds VMEM, tile C*R with an
        # R-column carry across grid steps instead of full-width rows.
    grid_b = pl.cdiv(B, tile_b)
    need_row_mask = (B % tile_b) != 0

    kernel = functools.partial(
        _trend_kernel_2d, trend_weight=float(trend_weight),
        n_mse=int(n_mse), n_trend=int(n_trend), b_total=int(B),
        tile_b=int(tile_b), m_dim=int(M), r_dim=int(R), c_dim=int(C),
        need_row_mask=bool(need_row_mask))

    out = pl.pallas_call(
        kernel,
        out_shape=jax.ShapeDtypeStruct((1, 1), jnp.float32),
        grid_spec=pltpu.PrefetchScalarGridSpec(
            num_scalar_prefetch=0,
            grid=(grid_b,),
            in_specs=[pl.BlockSpec((tile_b, M), lambda i: (i, 0)),
                      pl.BlockSpec((tile_b, M), lambda i: (i, 0))],
            out_specs=pl.BlockSpec((1, 1), lambda i: (0, 0),
                                   memory_space=pltpu.SMEM),
            scratch_shapes=[pltpu.VMEM((1, M), jnp.float32),
                            pltpu.VMEM((1, max(M - R, 1)), jnp.float32)],
        ),
        compiler_params=pltpu.CompilerParams(
            dimension_semantics=("arbitrary",),
            vmem_limit_bytes=int(vmem_limit)),
        cost_estimate=cost,
    )(pred2, target2)
    return out[0, 0]


# ----------------------------------------------------------------------------
# Pure-JAX reference
# ----------------------------------------------------------------------------

def trend_loss_ref(pred, target, trend_weight=0.3):
    p = pred.astype(jnp.float32)
    t = target.astype(jnp.float32)
    mse = jnp.mean((p - t) ** 2)
    if pred.shape[1] > 1:
        pt = p[:, 1:] - p[:, :-1]
        tt = t[:, 1:] - t[:, :-1]
        trend = jnp.mean((pt - tt) ** 2)
    else:
        trend = jnp.float32(0.0)
    return mse + jnp.float32(trend_weight) * trend


if __name__ == "__main__":
    key = jax.random.PRNGKey(0)
    k1, k2, k3, k4 = jax.random.split(key, 4)
    tw = 0.3

    # 4-D case: batch=2, channels(=trend axis)=4, spatial 16x16  -> path A
    shape_a = (2, 4, 16, 16)
    pred_a = jax.random.normal(k1, shape_a, dtype=jnp.float32)
    tgt_a = jax.random.normal(k2, shape_a, dtype=jnp.float32)
    out_a = trend_loss(pred_a, tgt_a, trend_weight=tw)
    jax.block_until_ready(out_a)
    ref_a = trend_loss_ref(pred_a, tgt_a, trend_weight=tw)
    assert jnp.allclose(out_a, ref_a, rtol=1e-5, atol=1e-6), (out_a, ref_a)

    # 2-D case (batch=4, horizon=8)  -> lane-dense small-R path B
    shape_b = (4, 8)
    pred_b = jax.random.normal(k3, shape_b, dtype=jnp.float32)
    tgt_b = jax.random.normal(k4, shape_b, dtype=jnp.float32)
    out_b = trend_loss(pred_b, tgt_b, trend_weight=tw)
    jax.block_until_ready(out_b)
    ref_b = trend_loss_ref(pred_b, tgt_b, trend_weight=tw)
    assert jnp.allclose(out_b, ref_b, rtol=1e-5, atol=1e-6), (out_b, ref_b)

    print("KERNEL_OK")
</pallas_src>

<mosaic_0001>
module attributes {stable_mosaic.version = 11 : i64} {
  func.func @_trend_kernel_3d(%arg0: i32, %arg1: i32, %arg2: i32, %arg3: memref<2x4x256xf32, #tpu.memory_space<vmem>>, %arg4: memref<2x4x256xf32, #tpu.memory_space<vmem>>, %arg5: memref<1x1xf32, #tpu.memory_space<smem>>, %arg6: memref<4x256xf32, #tpu.memory_space<vmem>>, %arg7: memref<3x256xf32, #tpu.memory_space<vmem>>) attributes {dimension_semantics = [#tpu.dimension_semantics<parallel>, #tpu.dimension_semantics<arbitrary>, #tpu.dimension_semantics<arbitrary>], iteration_bounds = array<i64: 1, 1, 1>, scalar_prefetch = 0 : i64, scratch_operands = 2 : i64, tpu.core_type = #tpu.core_type<tc>, window_params = [{transform_indices = @transform_0, window_bounds = array<i64: 2, 4, 256>}, {transform_indices = @transform_1, window_bounds = array<i64: 2, 4, 256>}, {transform_indices = @transform_2, window_bounds = array<i64: 1, 1>}]} {
    %c0_i32 = arith.constant 0 : i32
    %0 = arith.cmpi eq, %arg1, %c0_i32 : i32
    %c0_i32_0 = arith.constant 0 : i32
    %1 = arith.cmpi eq, %arg2, %c0_i32_0 : i32
    %2 = arith.andi %0, %1 : i1
    %3 = arith.extui %2 : i1 to i32
    %c0_i32_1 = arith.constant 0 : i32
    %4 = arith.cmpi ne, %3, %c0_i32_1 : i32
    scf.if %4 {
      %cst_19 = arith.constant 0.000000e+00 : f32
      %26 = vector.broadcast %cst_19 : f32 to vector<4x256xf32>
      %c0_20 = arith.constant 0 : index
      %c0_21 = arith.constant 0 : index
      %27 = vector.load %arg6[%c0_20, %c0_21] : memref<4x256xf32, #tpu.memory_space<vmem>>, vector<4x256xf32>
      tpu.vector_store %arg6[%c0_20, %c0_21], %26 {strides = array<i32>} : memref<4x256xf32, #tpu.memory_space<vmem>>, vector<4x256xf32>,
      %cst_22 = arith.constant 0.000000e+00 : f32
      %28 = vector.broadcast %cst_22 : f32 to vector<3x256xf32>
      %c0_23 = arith.constant 0 : index
      %c0_24 = arith.constant 0 : index
      %29 = vector.load %arg7[%c0_23, %c0_24] : memref<3x256xf32, #tpu.memory_space<vmem>>, vector<3x256xf32>
      tpu.vector_store %arg7[%c0_23, %c0_24], %28 {strides = array<i32>} : memref<3x256xf32, #tpu.memory_space<vmem>>, vector<3x256xf32>,
    } else {
    }
    %c0 = arith.constant 0 : index
    %c0_2 = arith.constant 0 : index
    %c0_3 = arith.constant 0 : index
    %5 = vector.load %arg4[%c0, %c0_2, %c0_3] : memref<2x4x256xf32, #tpu.memory_space<vmem>>, vector<2x4x256xf32>
    %c0_4 = arith.constant 0 : index
    %c0_5 = arith.constant 0 : index
    %c0_6 = arith.constant 0 : index
    %6 = vector.load %arg3[%c0_4, %c0_5, %c0_6] : memref<2x4x256xf32, #tpu.memory_space<vmem>>, vector<2x4x256xf32>
    %7 = arith.subf %5, %6 : vector<2x4x256xf32>
    %8 = arith.mulf %7, %7 : vector<2x4x256xf32>
    %c0_7 = arith.constant 0 : index
    %c0_8 = arith.constant 0 : index
    %9 = vector.load %arg6[%c0_7, %c0_8] : memref<4x256xf32, #tpu.memory_space<vmem>>, vector<4x256xf32>
    %cst = arith.constant dense<0.000000e+00> : vector<4x256xf32>
    %10 = vector.multi_reduction <add>, %8, %cst [0] : vector<2x4x256xf32> to vector<4x256xf32>
    %11 = arith.addf %9, %10 : vector<4x256xf32>
    %c0_9 = arith.constant 0 : index
    %c0_10 = arith.constant 0 : index
    %12 = vector.load %arg6[%c0_9, %c0_10] : memref<4x256xf32, #tpu.memory_space<vmem>>, vector<4x256xf32>
    tpu.vector_store %arg6[%c0_9, %c0_10], %11 {strides = array<i32>} : memref<4x256xf32, #tpu.memory_space<vmem>>, vector<4x256xf32>,
    %13 = vector.extract_strided_slice %7 {offsets = [0, 1, 0], sizes = [2, 3, 256], strides = [1, 1, 1]} : vector<2x4x256xf32> to vector<2x3x256xf32>
    %14 = vector.extract_strided_slice %7 {offsets = [0, 0, 0], sizes = [2, 3, 256], strides = [1, 1, 1]} : vector<2x4x256xf32> to vector<2x3x256xf32>
    %15 = arith.subf %13, %14 : vector<2x3x256xf32>
    %16 = arith.mulf %15, %15 : vector<2x3x256xf32>
    %c0_11 = arith.constant 0 : index
    %c0_12 = arith.constant 0 : index
    %17 = vector.load %arg7[%c0_11, %c0_12] : memref<3x256xf32, #tpu.memory_space<vmem>>, vector<3x256xf32>
    %cst_13 = arith.constant dense<0.000000e+00> : vector<3x256xf32>
    %18 = vector.multi_reduction <add>, %16, %cst_13 [0] : vector<2x3x256xf32> to vector<3x256xf32>
    %19 = arith.addf %17, %18 : vector<3x256xf32>
    %c0_14 = arith.constant 0 : index
    %c0_15 = arith.constant 0 : index
    %20 = vector.load %arg7[%c0_14, %c0_15] : memref<3x256xf32, #tpu.memory_space<vmem>>, vector<3x256xf32>
    tpu.vector_store %arg7[%c0_14, %c0_15], %19 {strides = array<i32>} : memref<3x256xf32, #tpu.memory_space<vmem>>, vector<3x256xf32>,
    %c0_i32_16 = arith.constant 0 : i32
    %21 = arith.cmpi eq, %arg1, %c0_i32_16 : i32
    %c0_i32_17 = arith.constant 0 : i32
    %22 = arith.cmpi eq, %arg2, %c0_i32_17 : i32
    %23 = arith.andi %21, %22 : i1
    %24 = arith.extui %23 : i1 to i32
    %c0_i32_18 = arith.constant 0 : i32
    %25 = arith.cmpi ne, %24, %c0_i32_18 : i32
    scf.if %25 {
      %c0_19 = arith.constant 0 : index
      %c0_20 = arith.constant 0 : index
      %26 = vector.load %arg6[%c0_19, %c0_20] : memref<4x256xf32, #tpu.memory_space<vmem>>, vector<4x256xf32>
      %27 = vector.shape_cast %26 : vector<4x256xf32> to vector<1x4x256xf32>
      %cst_21 = arith.constant dense<0.000000e+00> : vector<1xf32>
      %28 = vector.multi_reduction <add>, %27, %cst_21 [1, 2] : vector<1x4x256xf32> to vector<1xf32>
      %29 = vector.shape_cast %28 : vector<1xf32> to vector<1x1x1xf32>
      %30 = vector.extract %29[0, 0, 0] : f32 from vector<1x1x1xf32>
      %cst_22 = arith.constant 2.048000e+03 : f32
      %31 = arith.divf %30, %cst_22 : f32
      %c0_23 = arith.constant 0 : index
      %c0_24 = arith.constant 0 : index
      %32 = vector.load %arg7[%c0_23, %c0_24] : memref<3x256xf32, #tpu.memory_space<vmem>>, vector<3x256xf32>
      %33 = vector.shape_cast %32 : vector<3x256xf32> to vector<1x3x256xf32>
      %cst_25 = arith.constant dense<0.000000e+00> : vector<1xf32>
      %34 = vector.multi_reduction <add>, %33, %cst_25 [1, 2] : vector<1x3x256xf32> to vector<1xf32>
      %35 = vector.shape_cast %34 : vector<1xf32> to vector<1x1x1xf32>
      %36 = vector.extract %35[0, 0, 0] : f32 from vector<1x1x1xf32>
      %cst_26 = arith.constant 1.536000e+03 : f32
      %37 = arith.divf %36, %cst_26 : f32
      %cst_27 = arith.constant 3.000000e-01 : f32
      %38 = arith.mulf %cst_27, %37 : f32
      %39 = arith.addf %31, %38 : f32
      %c0_28 = arith.constant 0 : index
      %c0_29 = arith.constant 0 : index
      %40 = memref.load %arg5[%c0_28, %c0_29] : memref<1x1xf32, #tpu.memory_space<smem>>
      memref.store %39, %arg5[%c0_28, %c0_29] : memref<1x1xf32, #tpu.memory_space<smem>>
    } else {
    }
    return
  }
  func.func @transform_0(%arg0: i32, %arg1: i32, %arg2: i32) -> (i32, i32, i32) {
    %c1_i32 = arith.constant 1 : i32
    %0 = arith.muli %arg0, %c1_i32 : i32
    %1 = arith.addi %0, %arg2 : i32
    %c0_i32 = arith.constant 0 : i32
    %2 = arith.minsi %1, %c0_i32 : i32
    %c0_i32_0 = arith.constant 0 : i32
    %c0_i32_1 = arith.constant 0 : i32
    return %arg1, %c0_i32_0, %2 : i32, i32, i32
  }
  func.func @transform_1(%arg0: i32, %arg1: i32, %arg2: i32) -> (i32, i32, i32) {
    %c1_i32 = arith.constant 1 : i32
    %0 = arith.muli %arg0, %c1_i32 : i32
    %1 = arith.addi %0, %arg2 : i32
    %c0_i32 = arith.constant 0 : i32
    %2 = arith.minsi %1, %c0_i32 : i32
    %c0_i32_0 = arith.constant 0 : i32
    %c0_i32_1 = arith.constant 0 : i32
    return %arg1, %c0_i32_0, %2 : i32, i32, i32
  }
  func.func @transform_2(%arg0: i32, %arg1: i32, %arg2: i32) -> (i32, i32) {
    %c0_i32 = arith.constant 0 : i32
    %c0_i32_0 = arith.constant 0 : i32
    return %arg0, %c0_i32 : i32, i32
  }
}

</mosaic_0001>

<llo_original>
// kernel: tpu_custom_call.1
$region0: #{tpu_custom_call.1}
  #allocation0 [shape = 'u32[]', space=smem, size = 0x4, offset = 0x4, fixed_abs, tag = 'smem constant byte address 0x4 - core index']
  #allocation1 [shape = 'u32[144,128]{1,0:T(1,128)}', space=vmem, size = 0x12000, scoped, tag = 'internal scratch']
  #allocation2 [shape = 'f32[4,256]{1,0:T(4,128)}', space=vmem, size = 0x1000, scoped, tag = 'scratch operand']
  #allocation3 [shape = 'f32[3,256]{1,0:T(4,128)}', space=vmem, size = 0x1000, scoped, tag = 'scratch operand']
  %s0 = inlined_call_operand.hbm [shape: f32[2,4,256], index: 0, kind: input, shape index: {}]
  %s1 = inlined_call_operand.hbm [shape: f32[2,4,256], index: 1, kind: input, shape index: {}]
  %s2 = inlined_call_operand.hbm [shape: f32[1,1], index: 2, kind: output, shape index: {}]
  %s3 = sld [smem:[#allocation0]]
  $region34: #{tpu_custom_call.1} parent=0
    _
  %s5 = ssub.s32 1, %s3
  %s6 = scalar_select 0, %s5, %s3
  $region1: #{tpu_custom_call.1} parent=0
    #allocation4 [shape = 'u8[8192]{0}', space=vmem, size = 0x2000, scoped, tag = 'input window, operand 0, single buffered']
    #allocation5 [shape = 's32[1]{0}', space=sflag, size = 0x4, scoped, tag = 'scoped memory for tpu_custom_call.1']
    #allocation6 [shape = 's32[1]{0}', space=sflag, size = 0x4, scoped, tag = 'scoped memory for tpu_custom_call.1']
    #allocation7 [shape = 'u8[8192]{0}', space=vmem, size = 0x2000, scoped, tag = 'input window, operand 1, single buffered']
    #allocation8 [shape = 's32[1]{0}', space=sflag, size = 0x4, scoped, tag = 'scoped memory for tpu_custom_call.1']
    #allocation9 [shape = 'u8[512]{0}', space=smem, size = 0x200, scoped, tag = 'output window, operand 0, single buffered']
    %7 = vsyncpa [#allocation5], 0
    %8 = vsyncpa [#allocation8], 0
    %9 = vsyncpa [#allocation6], 0
    // Predicated region
    $region2: #{tpu_custom_call.1} parent=1 // pred_check
      _
    $region3: #{tpu_custom_call.1} parent=1 // pred_check_branch
      %11 = sbr.rel (0) target = $region5
    $region4: #{tpu_custom_call.1} parent=1 // pred_region
      %s12 = sadd.s32 0, 0
      %p13 = scmp.lt.s32.totalorder %s12, 0
      %s14 = scalar_select %p13, %s12, 0
      %s15 = smul.u32 2, %s14
      %s17 = ssub.s32 256, 256
      %18 = vsyncadd [#allocation5], %s17
      %s19 = smul.addr %s15, 64
      %s20 = scalar_lea.hbm %s0, %s19
      %s21 = sshll.u32 [#allocation4], 4
      %s22 = int_to_ptr.vmem [resolvable:$true] %s21
      %27 = dma.hbm_to_vmem [thread:$0]  %s20, 256, %s22, [#allocation5], 128, 128, 8
    $region5: #{tpu_custom_call.1} parent=1 // pred_fallthru
      _
    // Predicated region
    $region6: #{tpu_custom_call.1} parent=1 // pred_check
      _
    $region7: #{tpu_custom_call.1} parent=1 // pred_check_branch
      %29 = sbr.rel (0) target = $region9
    $region8: #{tpu_custom_call.1} parent=1 // pred_region
      %s30 = sadd.s32 0, 0
      %p31 = scmp.lt.s32.totalorder %s30, 0
      %s32 = scalar_select %p31, %s30, 0
      %s33 = smul.u32 2, %s32
      %s35 = ssub.s32 256, 256
      %36 = vsyncadd [#allocation8], %s35
      %s37 = smul.addr %s33, 64
      %s38 = scalar_lea.hbm %s1, %s37
      %s39 = sshll.u32 [#allocation7], 4
      %s40 = int_to_ptr.vmem [resolvable:$true] %s39
      %45 = dma.hbm_to_vmem [thread:$0]  %s38, 256, %s40, [#allocation8], 128, 128, 8
    $region9: #{tpu_custom_call.1} parent=1 // pred_fallthru
      _
    // Predicated region
    $region10: #{tpu_custom_call.1} parent=1 // pred_check
      _
    $region11: #{tpu_custom_call.1} parent=1 // pred_check_branch
      %47 = sbr.rel (0) target = $region13
    $region12: #{tpu_custom_call.1} parent=1 // pred_region
      %48 = dma.done [#allocation5], 256
    $region13: #{tpu_custom_call.1} parent=1 // pred_fallthru
      _
    // Predicated region
    $region14: #{tpu_custom_call.1} parent=1 // pred_check
      _
    $region15: #{tpu_custom_call.1} parent=1 // pred_check_branch
      %50 = sbr.rel (0) target = $region17
    $region16: #{tpu_custom_call.1} parent=1 // pred_region
      %51 = dma.done [#allocation8], 256
    $region17: #{tpu_custom_call.1} parent=1 // pred_fallthru
      _
    %s52 = sadd.s32 0, 0
    %p53 = scmp.lt.s32.totalorder %s52, 0
    %s54 = scalar_select %p53, %s52, 0
    %s55 = smul.u32 2, %s54
    %s56 = sadd.s32 0, 0
    %p57 = scmp.lt.s32.totalorder %s56, 0
    %s58 = scalar_select %p57, %s56, 0
    %s59 = smul.u32 2, %s58
    %p60 = scmp.eq.s32.totalorder 0, 0
    %p61 = scmp.eq.s32.totalorder 0, 0
    %p62 = pnand %p60, %p61
    %p63 = pneg %p62
    // Predicated region
    $region18: #{tpu_custom_call.1} parent=1 // pred_check
      _
    $region19: #{tpu_custom_call.1} parent=1 // pred_check_branch
      %65 = sbr.rel (%p62) target = $region21
    $region20: #{tpu_custom_call.1} parent=1 // pred_region
      %66 = vst [vmem:[#allocation2] sm:$0xff] 0.0
      %67 = vst [vmem:[#allocation3] sm:$0x77] 0.0
    $region21: #{tpu_custom_call.1} parent=1 // pred_fallthru
      _
    %v68 = vld [vmem:[#allocation7] sm:$0xff]
    %v69 = vld [vmem:[#allocation7 + $0x8] sm:$0xff]
    %v70 = vld [vmem:[#allocation4] sm:$0xff]
    %v71 = vld [vmem:[#allocation4 + $0x8] sm:$0xff]
    %v72 = vsub.f32 %v68, %v70
    %v73 = vsub.f32 %v69, %v71
    %v74 = vmul.f32 %v72, %v72
    %v75 = vmul.f32 %v73, %v73
    %v76 = vld [vmem:[#allocation2] sm:$0xff]
    %v79 = vcombine.high %v74, %v74
    %v80 = vcombine.high %v75, %v75
    %vm83 = vcmask 1043456
    %v84 = vsel %vm83, %v74, 0.0
    %v85 = vsel %vm83, %v75, 0.0
    %v86 = vadd.f32 %v84, %v85
    %v87 = vsel %vm83, %v79, 0.0
    %v88 = vsel %vm83, %v80, 0.0
    %v89 = vadd.f32 %v87, %v88
    %v92 = vcombine.low %v86, %v89
    %v94 = vadd.f32 %v76, %v92
    %95 = vst [vmem:[#allocation2] sm:$0xff] %v94
    %v98 = vrot.slane %v72, 7
    %v99 = vrot.slane %v73, 7
    %v102 = vsub.f32 %v72, %v98
    %v103 = vsub.f32 %v73, %v99
    %v104 = vmul.f32 %v102, %v102
    %v105 = vmul.f32 %v103, %v103
    %v106 = vld [vmem:[#allocation3] sm:$0x77]
    %v109 = vcombine.high %v104, %v104
    %v110 = vcombine.high %v105, %v105
    %vm113 = vcmask 1043457
    %v114 = vsel %vm113, %v104, 0.0
    %v115 = vsel %vm113, %v105, 0.0
    %v116 = vadd.f32 %v114, %v115
    %v117 = vsel %vm113, %v109, 0.0
    %v118 = vsel %vm113, %v110, 0.0
    %v119 = vadd.f32 %v117, %v118
    %v122 = vcombine.low %v116, %v119
    %v123 = vrot.slane %v122, 5
    %v124 = vrot.slane %v123, 4
    %v126 = vadd.f32 %v106, %v124
    %127 = vst [vmem:[#allocation3] sm:$0x77] %v126
    // Predicated region
    $region22: #{tpu_custom_call.1} parent=1 // pred_check
      _
    $region23: #{tpu_custom_call.1} parent=1 // pred_check_branch
      %129 = sbr.rel (%p62) target = $region25
    $region24: #{tpu_custom_call.1} parent=1 // pred_region
      %v130 = vld [vmem:[#allocation2] sm:$0xff]
      %v132 = vcombine.high %v130, %v130
      %v134 = vsel %vm83, %v130, 0.0
      %v135 = vsel %vm83, %v132, 0.0
      %v136 = vadd.f32 %v134, %v135
      %137 = vadd.xlane.f32.xlu0 %v136
      %v138 = vpop.xlane.xlu0 %137
      %v139 = vrot.slane %v138, 4
      %v140 = vadd.f32 %v138, %v139
      %v141 = vrot.slane %v140, 2
      %v142 = vadd.f32 %v140, %v141
      %v143 = vrot.slane %v142, 1
      %v144 = vadd.f32 %v142, %v143
      %s145 = vtos %v144
      %v146 = vrcp.pop 2048.0
      %s147 = vtos %v146
      %s148 = smul.f32 %s145, %s147
      %v149 = vld [vmem:[#allocation3] sm:$0x77]
      %v151 = vcombine.high %v149, %v149
      %vm153 = vcmask 1042432
      %v154 = vsel %vm153, %v149, 0.0
      %v155 = vsel %vm153, %v151, 0.0
      %v156 = vadd.f32 %v154, %v155
      %157 = vadd.xlane.f32.xlu0 %v156
      %v158 = vpop.xlane.xlu0 %157
      %v159 = vrot.slane %v158, 4
      %v160 = vadd.f32 %v158, %v159
      %v161 = vrot.slane %v160, 2
      %v162 = vadd.f32 %v160, %v161
      %v163 = vrot.slane %v162, 1
      %v164 = vadd.f32 %v162, %v163
      %s165 = vtos %v164
      %v166 = vrcp.pop 1536.0
      %s167 = vtos %v166
      %s168 = smul.f32 %s165, %s167
      %s169 = smul.f32 %s168, 0.3
      %s170 = sadd.f32 %s148, %s169
      %s171 = scalar_lea.smem [#allocation9], 0
      %172 = sst [smem:[%s171]] %s170
    $region25: #{tpu_custom_call.1} parent=1 // pred_fallthru
      _
    // Predicated region
    $region26: #{tpu_custom_call.1} parent=1 // pred_check
      _
    $region27: #{tpu_custom_call.1} parent=1 // pred_check_branch
      %174 = sbr.rel (0) target = $region29
    $region28: #{tpu_custom_call.1} parent=1 // pred_region
      %s176 = ssub.s32 16, 16
      %177 = vsyncadd [#allocation6], %s176
      %180 = dma.smem_to_hbm [#allocation9], 16, %s2, [#allocation6]
    $region29: #{tpu_custom_call.1} parent=1 // pred_fallthru
      _
    // Predicated region
    $region30: #{tpu_custom_call.1} parent=1 // pred_check
      _
    $region31: #{tpu_custom_call.1} parent=1 // pred_check_branch
      %182 = sbr.rel (0) target = $region33
    $region32: #{tpu_custom_call.1} parent=1 // pred_region
      %183 = dma.done [#allocation6], 16
    $region33: #{tpu_custom_call.1} parent=1 // pred_fallthru
      _
    %184 = sfence
    %185 = vsyncpa [#allocation5], 1
    %186 = vsyncpa [#allocation8], 1
    %187 = vsyncpa [#allocation6], 1

</llo_original>
